<compile_context>
chip_gen: v7x
topology: tpu7x:2x2x1
jax: 0.10.0
libtpu: 0.0.40
codegen_flags: <defaults>
</compile_context>

<pallas_src>
import jax
import jax.numpy as jnp
from jax.experimental import pallas as pl
from jax.experimental.pallas import tpu as pltpu


def fusion_kernel(h_ref, d_ref, w1_ref, b1_ref, w2_ref, o_ref):
    h = h_ref[...]                                  # (TM, L) f32, lane-dense
    d = d_ref[...]                                  # (TM, L)
    tm = h.shape[0]

    # One fused MXU matmul for both branches: [hidden; dy_emb] @ blockdiag(W1^T) + b1
    x = jnp.concatenate([h, d], axis=0)             # (2*TM, L)
    t = jnp.tanh(
        jnp.dot(x, w1_ref[...], preferred_element_type=jnp.float32) + b1_ref[...]
    )                                               # (2*TM, L)

    # linear2 (no bias; b2 cancels in the stack-axis softmax).  The block-diagonal
    # w2 "expand" weight reduces each D-lane group and broadcasts the scalar score
    # back across that group in a single MXU op.
    s = jnp.dot(t, w2_ref[...], preferred_element_type=jnp.float32)   # (2*TM, L)
    sh = s[:tm]                                     # score of hidden branch
    sd = s[tm:]                                     # score of dy_emb branch

    # softmax over the 2-element stack axis == sigmoid gate on the difference.
    g = jax.nn.sigmoid(sh - sd)                     # weight of the hidden branch
    o_ref[...] = (d + g * (h - d)).astype(o_ref.dtype)


def _round_up(x, m):
    return (x + m - 1) // m * m


def fusion_forward(hidden, dy_emb, w1, b1, w2, b2=None, *, max_tile_rows=1024):
    """Fusion forward.

    hidden, dy_emb : (N, D) float arrays.
    w1 : (D, D) torch layout (out, in);  b1 : (D,)
    w2 : (1, D) torch layout;            b2 : (1,)  (unused: cancels in the softmax)
    """
    del b2  # softmax over the stack axis cancels a shared additive constant
    N, D = hidden.shape

    # Lane packing factor: R consecutive logical rows per 128-lane physical row.
    R = 128 // D if (D < 128 and 128 % D == 0) else 1
    L = R * D

    # --- parameters, rearranged once wrapper-side -------------------------------
    w1_t = jnp.asarray(w1, jnp.float32).T                       # (D, D): x @ w1_t
    b1_v = jnp.asarray(b1, jnp.float32).reshape(1, D)
    w2_col = jnp.asarray(w2, jnp.float32).reshape(D, 1)         # (D, 1)

    eye_r = jnp.eye(R, dtype=jnp.float32)
    w1_blk = jnp.kron(eye_r, w1_t)                              # (L, L) block-diag
    b1_blk = jnp.tile(b1_v, (1, R))                             # (1, L)
    # reduce-and-broadcast weight: block (i,i) = w2_col @ ones(1, D)
    w2_blk = jnp.kron(eye_r, w2_col * jnp.ones((1, D), jnp.float32))   # (L, L)

    # --- row packing + padding ---------------------------------------------------
    n_pack = -(-N // R)                       # packed rows needed
    pad_logical = n_pack * R - N              # logical-row pad so N % R == 0

    tile_m = min(max_tile_rows, _round_up(n_pack, 8))
    tile_m = _round_up(tile_m, 8)
    m_pad = _round_up(n_pack, tile_m)         # packed rows padded to tile multiple
    grid = (m_pad // tile_m,)

    def pack(x):
        x = jnp.asarray(x, jnp.float32)
        if pad_logical:
            x = jnp.pad(x, ((0, pad_logical), (0, 0)))
        x = x.reshape(n_pack, L)              # free row-major reshape
        if m_pad != n_pack:
            x = jnp.pad(x, ((0, m_pad - n_pack), (0, 0)))
        return x

    h_p = pack(hidden)
    d_p = pack(dy_emb)

    out_p = pl.pallas_call(
        fusion_kernel,
        out_shape=jax.ShapeDtypeStruct((m_pad, L), jnp.float32),
        grid_spec=pltpu.PrefetchScalarGridSpec(
            num_scalar_prefetch=0,
            grid=grid,
            in_specs=[
                pl.BlockSpec((tile_m, L), lambda i: (i, 0)),    # hidden rows
                pl.BlockSpec((tile_m, L), lambda i: (i, 0)),    # dy_emb rows
                pl.BlockSpec((L, L), lambda i: (0, 0)),         # w1 block-diag
                pl.BlockSpec((1, L), lambda i: (0, 0)),         # b1 tiled
                pl.BlockSpec((L, L), lambda i: (0, 0)),         # w2 expand
            ],
            out_specs=pl.BlockSpec((tile_m, L), lambda i: (i, 0)),
        ),
        compiler_params=pltpu.CompilerParams(
            dimension_semantics=("parallel",)),
    )(h_p, d_p, w1_blk, b1_blk, w2_blk)

    # unpack: drop padded packed rows, restore (N, D)
    out = out_p[:n_pack].reshape(n_pack * R, D)[:N]
    return out


def fusion_reference(hidden, dy_emb, w1, b1, w2, b2):
    emb = jnp.stack([hidden, dy_emb], axis=0)                   # (2, N, D)
    t = jnp.tanh(emb @ w1.T + b1)                               # (2, N, D)
    s = t @ w2.T + b2                                           # (2, N, 1)
    score = jax.nn.softmax(s, axis=0)
    return jnp.sum(score * emb, axis=0)                         # (N, D)


if __name__ == "__main__":
    key = jax.random.PRNGKey(0)
    D, OUT = 32, 1

    k_h, k_d, k_w1, k_b1, k_w2, k_b2 = jax.random.split(key, 6)

    # Parameter init mirroring the module's __init__:
    #   linear1/linear2 weights: xavier_normal_; biases: PyTorch default uniform.
    std1 = (2.0 / (D + D)) ** 0.5
    std2 = (2.0 / (D + OUT)) ** 0.5
    w1 = std1 * jax.random.normal(k_w1, (D, D), jnp.float32)    # torch layout (out, in)
    w2 = std2 * jax.random.normal(k_w2, (OUT, D), jnp.float32)
    bound = 1.0 / (D ** 0.5)
    b1 = jax.random.uniform(k_b1, (D,), jnp.float32, -bound, bound)
    b2 = jax.random.uniform(k_b2, (OUT,), jnp.float32, -bound, bound)

    # Case 1: N divisible by the packing factor.
    N = 256
    hidden = jax.random.normal(k_h, (N, D), jnp.float32)
    dy_emb = jax.random.normal(k_d, (N, D), jnp.float32)
    out = jax.block_until_ready(fusion_forward(hidden, dy_emb, w1, b1, w2, b2))
    ref = fusion_reference(hidden, dy_emb, w1, b1, w2, b2)
    assert out.shape == (N, D)
    assert jnp.allclose(out, ref, atol=1e-5, rtol=1e-5), "mismatch vs reference (N=256)"

    # Case 2: ragged N exercising the padding path.
    N2 = 100
    hidden2 = hidden[:N2]
    dy_emb2 = dy_emb[:N2]
    out2 = jax.block_until_ready(fusion_forward(hidden2, dy_emb2, w1, b1, w2, b2))
    ref2 = fusion_reference(hidden2, dy_emb2, w1, b1, w2, b2)
    assert out2.shape == (N2, D)
    assert jnp.allclose(out2, ref2, atol=1e-5, rtol=1e-5), "mismatch vs reference (N=100)"

    print("KERNEL_OK")
</pallas_src>

<mosaic_0001>
module attributes {stable_mosaic.version = 11 : i64} {
  func.func @fusion_kernel(%arg0: i32, %arg1: memref<64x128xf32, #tpu.memory_space<vmem>>, %arg2: memref<64x128xf32, #tpu.memory_space<vmem>>, %arg3: memref<128x128xf32, #tpu.memory_space<vmem>>, %arg4: memref<1x128xf32, #tpu.memory_space<vmem>>, %arg5: memref<128x128xf32, #tpu.memory_space<vmem>>, %arg6: memref<64x128xf32, #tpu.memory_space<vmem>>) attributes {dimension_semantics = [#tpu.dimension_semantics<parallel>], iteration_bounds = array<i64: 1>, scalar_prefetch = 0 : i64, scratch_operands = 0 : i64, tpu.core_type = #tpu.core_type<tc>, window_params = [{transform_indices = @transform_0, window_bounds = array<i64: 64, 128>}, {transform_indices = @transform_1, window_bounds = array<i64: 64, 128>}, {pipeline_mode = #tpu.pipeline_mode<synchronous>, transform_indices = @transform_2, window_bounds = array<i64: 128, 128>}, {pipeline_mode = #tpu.pipeline_mode<synchronous>, transform_indices = @transform_3, window_bounds = array<i64: 1, 128>}, {pipeline_mode = #tpu.pipeline_mode<synchronous>, transform_indices = @transform_4, window_bounds = array<i64: 128, 128>}, {transform_indices = @transform_5, window_bounds = array<i64: 64, 128>}]} {
    %c0 = arith.constant 0 : index
    %c0_0 = arith.constant 0 : index
    %0 = vector.load %arg1[%c0, %c0_0] : memref<64x128xf32, #tpu.memory_space<vmem>>, vector<64x128xf32>
    %c0_1 = arith.constant 0 : index
    %c0_2 = arith.constant 0 : index
    %1 = vector.load %arg2[%c0_1, %c0_2] : memref<64x128xf32, #tpu.memory_space<vmem>>, vector<64x128xf32>
    %2 = tpu.concatenate %0, %1 in 0 : vector<64x128xf32>, vector<64x128xf32> -> vector<128x128xf32>
    %c0_3 = arith.constant 0 : index
    %c0_4 = arith.constant 0 : index
    %3 = vector.load %arg3[%c0_3, %c0_4] : memref<128x128xf32, #tpu.memory_space<vmem>>, vector<128x128xf32>
    %cst = arith.constant dense<0.000000e+00> : vector<128x128xf32>
    %4 = tpu.matmul %2, %3, %cst {dimension_numbers = #tpu.dot_dimension_numbers<[1], [0], [0], [1], [0, 0, 1, 1], [], []>} : vector<128x128xf32>, vector<128x128xf32>, vector<128x128xf32> -> vector<128x128xf32>
    %c0_5 = arith.constant 0 : index
    %c0_6 = arith.constant 0 : index
    %5 = vector.load %arg4[%c0_5, %c0_6] : memref<1x128xf32, #tpu.memory_space<vmem>>, vector<1x128xf32>
    %6 = vector.broadcast %5 : vector<1x128xf32> to vector<128x128xf32>
    %7 = arith.addf %4, %6 : vector<128x128xf32>
    %8 = math.tanh %7 : vector<128x128xf32>
    %c0_7 = arith.constant 0 : index
    %c0_8 = arith.constant 0 : index
    %9 = vector.load %arg5[%c0_7, %c0_8] : memref<128x128xf32, #tpu.memory_space<vmem>>, vector<128x128xf32>
    %cst_9 = arith.constant dense<0.000000e+00> : vector<128x128xf32>
    %10 = tpu.matmul %8, %9, %cst_9 {dimension_numbers = #tpu.dot_dimension_numbers<[1], [0], [0], [1], [0, 0, 1, 1], [], []>} : vector<128x128xf32>, vector<128x128xf32>, vector<128x128xf32> -> vector<128x128xf32>
    %11 = vector.extract_strided_slice %10 {offsets = [0, 0], sizes = [64, 128], strides = [1, 1]} : vector<128x128xf32> to vector<64x128xf32>
    %12 = vector.extract_strided_slice %10 {offsets = [64, 0], sizes = [64, 128], strides = [1, 1]} : vector<128x128xf32> to vector<64x128xf32>
    %13 = arith.subf %11, %12 : vector<64x128xf32>
    %14 = arith.negf %13 : vector<64x128xf32>
    %15 = math.exp %14 : vector<64x128xf32>
    %cst_10 = arith.constant 1.000000e+00 : f32
    %16 = vector.broadcast %cst_10 : f32 to vector<64x128xf32>
    %17 = arith.addf %16, %15 : vector<64x128xf32>
    %18 = arith.divf %16, %17 : vector<64x128xf32>
    %19 = arith.subf %0, %1 : vector<64x128xf32>
    %20 = arith.mulf %18, %19 : vector<64x128xf32>
    %21 = arith.addf %1, %20 : vector<64x128xf32>
    %c0_11 = arith.constant 0 : index
    %c0_12 = arith.constant 0 : index
    %22 = vector.load %arg6[%c0_11, %c0_12] : memref<64x128xf32, #tpu.memory_space<vmem>>, vector<64x128xf32>
    tpu.vector_store %arg6[%c0_11, %c0_12], %21 {strides = array<i32>} : memref<64x128xf32, #tpu.memory_space<vmem>>, vector<64x128xf32>,
    return
  }
  func.func @transform_0(%arg0: i32) -> (i32, i32) {
    %c0_i32 = arith.constant 0 : i32
    %c0_i32_0 = arith.constant 0 : i32
    return %arg0, %c0_i32 : i32, i32
  }
  func.func @transform_1(%arg0: i32) -> (i32, i32) {
    %c0_i32 = arith.constant 0 : i32
    %c0_i32_0 = arith.constant 0 : i32
    return %arg0, %c0_i32 : i32, i32
  }
  func.func @transform_2(%arg0: i32) -> (i32, i32) {
    %c0_i32 = arith.constant 0 : i32
    %c0_i32_0 = arith.constant 0 : i32
    %c0_i32_1 = arith.constant 0 : i32
    return %c0_i32, %c0_i32_0 : i32, i32
  }
  func.func @transform_3(%arg0: i32) -> (i32, i32) {
    %c0_i32 = arith.constant 0 : i32
    %c0_i32_0 = arith.constant 0 : i32
    %c0_i32_1 = arith.constant 0 : i32
    return %c0_i32, %c0_i32_0 : i32, i32
  }
  func.func @transform_4(%arg0: i32) -> (i32, i32) {
    %c0_i32 = arith.constant 0 : i32
    %c0_i32_0 = arith.constant 0 : i32
    %c0_i32_1 = arith.constant 0 : i32
    return %c0_i32, %c0_i32_0 : i32, i32
  }
  func.func @transform_5(%arg0: i32) -> (i32, i32) {
    %c0_i32 = arith.constant 0 : i32
    %c0_i32_0 = arith.constant 0 : i32
    return %arg0, %c0_i32 : i32, i32
  }
}

</mosaic_0001>

<llo_original>
// kernel: tpu_custom_call.1
$region0: #{tpu_custom_call.1}
  #allocation0 [shape = 'u32[]', space=smem, size = 0x4, offset = 0x4, fixed_abs, tag = 'smem constant byte address 0x4 - core index']
  #allocation1 [shape = 'u32[144,128]{1,0:T(1,128)}', space=vmem, size = 0x12000, scoped, tag = 'internal scratch']
  %s0 = inlined_call_operand.hbm [shape: f32[64,128], index: 0, kind: input, shape index: {}]
  %s1 = inlined_call_operand.hbm [shape: f32[64,128], index: 1, kind: input, shape index: {}]
  %s2 = inlined_call_operand.hbm [shape: f32[128,128], index: 2, kind: input, shape index: {}]
  %s3 = inlined_call_operand.vmem [shape: f32[1,128], index: 3, kind: input, shape index: {}]
  %s4 = inlined_call_operand.hbm [shape: f32[128,128], index: 4, kind: input, shape index: {}]
  %s5 = inlined_call_operand.hbm [shape: f32[64,128], index: 5, kind: output, shape index: {}]
  %s6 = sld [smem:[#allocation0]]
  $region46: #{tpu_custom_call.1} parent=0
    _
  %s8 = ssub.s32 1, %s6
  %s9 = scalar_select 0, %s8, %s6
  $region1: #{tpu_custom_call.1} parent=0
    #allocation2 [shape = 'u8[32768]{0}', space=vmem, size = 0x8000, scoped, tag = 'input window, operand 0, single buffered']
    #allocation3 [shape = 's32[1]{0}', space=sflag, size = 0x4, scoped, tag = 'scoped memory for tpu_custom_call.1']
    #allocation4 [shape = 's32[1]{0}', space=sflag, size = 0x4, scoped, tag = 'scoped memory for tpu_custom_call.1']
    #allocation5 [shape = 'u8[32768]{0}', space=vmem, size = 0x8000, scoped, tag = 'input window, operand 1, single buffered']
    #allocation6 [shape = 's32[1]{0}', space=sflag, size = 0x4, scoped, tag = 'scoped memory for tpu_custom_call.1']
    #allocation7 [shape = 'u8[65536]{0}', space=vmem, size = 0x10000, scoped, tag = 'input window, operand 2, single buffered']
    #allocation8 [shape = 'u8[65536]{0}', space=vmem, size = 0x10000, scoped, tag = 'input window, operand 4, single buffered']
    #allocation9 [shape = 's32[1]{0}', space=sflag, size = 0x4, scoped, tag = 'scoped memory for tpu_custom_call.1']
    #allocation10 [shape = 'u8[32768]{0}', space=vmem, size = 0x8000, scoped, tag = 'output window, operand 0, single buffered']
    %10 = vsyncpa [#allocation3], 0
    %11 = vsyncpa [#allocation6], 0
    %12 = vsyncpa [#allocation9], 0
    %13 = vsyncpa [#allocation4], 0
    // Predicated region
    $region2: #{tpu_custom_call.1} parent=1 // pred_check
      _
    $region3: #{tpu_custom_call.1} parent=1 // pred_check_branch
      %15 = sbr.rel (0) target = $region5
    $region4: #{tpu_custom_call.1} parent=1 // pred_region
      %s17 = ssub.s32 1024, 1024
      %18 = vsyncadd [#allocation3], %s17
      %s19 = sshll.u32 [#allocation2], 4
      %s20 = int_to_ptr.vmem [resolvable:$true] %s19
      %25 = dma.hbm_to_vmem [thread:$0]  %s0, 1024, %s20, [#allocation3], 128, 128, 8
    $region5: #{tpu_custom_call.1} parent=1 // pred_fallthru
      _
    // Predicated region
    $region6: #{tpu_custom_call.1} parent=1 // pred_check
      _
    $region7: #{tpu_custom_call.1} parent=1 // pred_check_branch
      %27 = sbr.rel (0) target = $region9
    $region8: #{tpu_custom_call.1} parent=1 // pred_region
      %s29 = ssub.s32 1024, 1024
      %30 = vsyncadd [#allocation6], %s29
      %s31 = sshll.u32 [#allocation5], 4
      %s32 = int_to_ptr.vmem [resolvable:$true] %s31
      %37 = dma.hbm_to_vmem [thread:$0]  %s1, 1024, %s32, [#allocation6], 128, 128, 8
    $region9: #{tpu_custom_call.1} parent=1 // pred_fallthru
      _
    // Predicated region
    $region10: #{tpu_custom_call.1} parent=1 // pred_check
      _
    $region11: #{tpu_custom_call.1} parent=1 // pred_check_branch
      %39 = sbr.rel (0) target = $region13
    $region12: #{tpu_custom_call.1} parent=1 // pred_region
      %s41 = ssub.s32 2048, 2048
      %42 = vsyncadd [#allocation6], %s41
      %s43 = sshll.u32 [#allocation7], 4
      %s44 = int_to_ptr.vmem [resolvable:$true] %s43
      %49 = dma.hbm_to_vmem [thread:$0]  %s2, 2048, %s44, [#allocation6], 128, 128, 8
    $region13: #{tpu_custom_call.1} parent=1 // pred_fallthru
      _
    // Predicated region
    $region14: #{tpu_custom_call.1} parent=1 // pred_check
      _
    $region15: #{tpu_custom_call.1} parent=1 // pred_check_branch
      %51 = sbr.rel (0) target = $region17
    $region16: #{tpu_custom_call.1} parent=1 // pred_region
      _
    $region17: #{tpu_custom_call.1} parent=1 // pred_fallthru
      _
    // Predicated region
    $region18: #{tpu_custom_call.1} parent=1 // pred_check
      _
    $region19: #{tpu_custom_call.1} parent=1 // pred_check_branch
      %53 = sbr.rel (0) target = $region21
    $region20: #{tpu_custom_call.1} parent=1 // pred_region
      %s55 = ssub.s32 2048, 2048
      %56 = vsyncadd [#allocation9], %s55
      %s57 = sshll.u32 [#allocation8], 4
      %s58 = int_to_ptr.vmem [resolvable:$true] %s57
      %63 = dma.hbm_to_vmem [thread:$0]  %s4, 2048, %s58, [#allocation9], 128, 128, 8
    $region21: #{tpu_custom_call.1} parent=1 // pred_fallthru
      _
    // Predicated region
    $region22: #{tpu_custom_call.1} parent=1 // pred_check
      _
    $region23: #{tpu_custom_call.1} parent=1 // pred_check_branch
      %65 = sbr.rel (0) target = $region25
    $region24: #{tpu_custom_call.1} parent=1 // pred_region
      %66 = dma.done [#allocation3], 1024
    $region25: #{tpu_custom_call.1} parent=1 // pred_fallthru
      _
    // Predicated region
    $region26: #{tpu_custom_call.1} parent=1 // pred_check
      _
    $region27: #{tpu_custom_call.1} parent=1 // pred_check_branch
      %68 = sbr.rel (0) target = $region29
    $region28: #{tpu_custom_call.1} parent=1 // pred_region
      %69 = dma.done [#allocation6], 1024
    $region29: #{tpu_custom_call.1} parent=1 // pred_fallthru
      _
    // Predicated region
    $region30: #{tpu_custom_call.1} parent=1 // pred_check
      _
    $region31: #{tpu_custom_call.1} parent=1 // pred_check_branch
      %71 = sbr.rel (0) target = $region33
    $region32: #{tpu_custom_call.1} parent=1 // pred_region
      %72 = dma.done [#allocation6], 2048
    $region33: #{tpu_custom_call.1} parent=1 // pred_fallthru
      _
    // Predicated region
    $region34: #{tpu_custom_call.1} parent=1 // pred_check
      _
    $region35: #{tpu_custom_call.1} parent=1 // pred_check_branch
      %74 = sbr.rel (0) target = $region37
    $region36: #{tpu_custom_call.1} parent=1 // pred_region
      %75 = dma.done [#allocation9], 2048
    $region37: #{tpu_custom_call.1} parent=1 // pred_fallthru
      _
    %v76 = vld [vmem:[#allocation2] sm:$0xff]
    %v77 = vld [vmem:[#allocation2 + $0x8] sm:$0xff]
    %v78 = vld [vmem:[#allocation2 + $0x10] sm:$0xff]
    %v79 = vld [vmem:[#allocation2 + $0x18] sm:$0xff]
    %v80 = vld [vmem:[#allocation2 + $0x20] sm:$0xff]
    %v81 = vld [vmem:[#allocation2 + $0x28] sm:$0xff]
    %v82 = vld [vmem:[#allocation2 + $0x30] sm:$0xff]
    %v83 = vld [vmem:[#allocation2 + $0x38] sm:$0xff]
    %v84 = vld [vmem:[#allocation5] sm:$0xff]
    %v85 = vld [vmem:[#allocation5 + $0x8] sm:$0xff]
    %v86 = vld [vmem:[#allocation5 + $0x10] sm:$0xff]
    %v87 = vld [vmem:[#allocation5 + $0x18] sm:$0xff]
    %v88 = vld [vmem:[#allocation5 + $0x20] sm:$0xff]
    %v89 = vld [vmem:[#allocation5 + $0x28] sm:$0xff]
    %v90 = vld [vmem:[#allocation5 + $0x30] sm:$0xff]
    %v91 = vld [vmem:[#allocation5 + $0x38] sm:$0xff]
    %v92 = vld [vmem:[#allocation7] sm:$0xff]
    %v93 = vld [vmem:[#allocation7 + $0x8] sm:$0xff]
    %v94 = vld [vmem:[#allocation7 + $0x10] sm:$0xff]
    %v95 = vld [vmem:[#allocation7 + $0x18] sm:$0xff]
    %v96 = vld [vmem:[#allocation7 + $0x20] sm:$0xff]
    %v97 = vld [vmem:[#allocation7 + $0x28] sm:$0xff]
    %v98 = vld [vmem:[#allocation7 + $0x30] sm:$0xff]
    %v99 = vld [vmem:[#allocation7 + $0x38] sm:$0xff]
    %v100 = vld [vmem:[#allocation7 + $0x40] sm:$0xff]
    %v101 = vld [vmem:[#allocation7 + $0x48] sm:$0xff]
    %v102 = vld [vmem:[#allocation7 + $0x50] sm:$0xff]
    %v103 = vld [vmem:[#allocation7 + $0x58] sm:$0xff]
    %v104 = vld [vmem:[#allocation7 + $0x60] sm:$0xff]
    %v105 = vld [vmem:[#allocation7 + $0x68] sm:$0xff]
    %v106 = vld [vmem:[#allocation7 + $0x70] sm:$0xff]
    %v107 = vld [vmem:[#allocation7 + $0x78] sm:$0xff]
    %v108 = vld [vmem:[%s3] sm:$0x1]
    %v110 = vlaneseq
    %v111 = vshrl.u32 %v110, 7
    %v112 = vsub.s32 0, %v111
    %v113 = vrot.slane %v108, %v112
    %115 = vmatprep.subr.mxu0 0.0
    %116 = vmatpush1.msra.mxu0 %v92
    %117 = vmatprep.subr.mxu0 0.0
    %118 = vmatpush1.msra.mxu0 %v93
    %119 = vmatprep.subr.mxu0 0.0
    %120 = vmatpush1.msra.mxu0 %v94
    %121 = vmatprep.subr.mxu0 0.0
    %122 = vmatpush1.msra.mxu0 %v95
    %123 = vmatprep.subr.mxu0 0.0
    %124 = vmatpush1.msra.mxu0 %v96
    %125 = vmatprep.subr.mxu0 0.0
    %126 = vmatpush1.msra.mxu0 %v97
    %127 = vmatprep.subr.mxu0 0.0
    %128 = vmatpush1.msra.mxu0 %v98
    %129 = vmatprep.subr.mxu0 0.0
    %130 = vmatpush1.msra.mxu0 %v99
    %131 = vmatprep.subr.mxu0 0.0
    %132 = vmatpush1.msra.mxu0 %v100
    %133 = vmatprep.subr.mxu0 0.0
    %134 = vmatpush1.msra.mxu0 %v101
    %135 = vmatprep.subr.mxu0 0.0
    %136 = vmatpush1.msra.mxu0 %v102
    %137 = vmatprep.subr.mxu0 0.0
    %138 = vmatpush1.msra.mxu0 %v103
    %139 = vmatprep.subr.mxu0 0.0
    %140 = vmatpush1.msra.mxu0 %v104
    %141 = vmatprep.subr.mxu0 0.0
    %142 = vmatpush1.msra.mxu0 %v105
    %143 = vmatprep.subr.mxu0 0.0
    %144 = vmatpush1.msra.mxu0 %v106
    %145 = vmatprep.subr.mxu0 0.0
    %146 = vmatpush1.msra.mxu0 %v107
    %147 = vmatprep.subr.mxu0 0.0
    %148 = vmatpush1.msra.mxu0 0.0
    %149 = vmatprep.subr.mxu0 0.0
    %150 = vmatpush1.msra.mxu0 0.0
    %151 = vmatprep.subr.mxu0 0.0
    %152 = vmatpush1.msra.mxu0 0.0
    %153 = vmatprep.subr.mxu0 0.0
    %154 = vmatpush1.msra.mxu0 0.0
    %155 = vmatprep.subr.mxu0 0.0
    %156 = vmatpush1.msra.mxu0 0.0
    %157 = vmatprep.subr.mxu0 0.0
    %158 = vmatpush1.msra.mxu0 0.0
    %159 = vmatprep.subr.mxu0 0.0
    %160 = vmatpush1.msra.mxu0 0.0
    %161 = vmatprep.subr.mxu0 0.0
    %162 = vmatpush1.msra.mxu0 0.0
    %163 = vmatprep.subr.mxu0 0.0
    %164 = vmatpush1.msra.mxu0 0.0
    %165 = vmatprep.subr.mxu0 0.0
    %166 = vmatpush1.msra.mxu0 0.0
    %167 = vmatprep.subr.mxu0 0.0
    %168 = vmatpush1.msra.mxu0 0.0
    %169 = vmatprep.subr.mxu0 0.0
    %170 = vmatpush1.msra.mxu0 0.0
    %171 = vmatprep.subr.mxu0 0.0
    %172 = vmatpush1.msra.mxu0 0.0
    %173 = vmatprep.subr.mxu0 0.0
    %174 = vmatpush1.msra.mxu0 0.0
    %175 = vmatprep.subr.mxu0 0.0
    %176 = vmatpush1.msra.mxu0 0.0
    %177 = vmatprep.subr.mxu0 0.0
    %178 = vmatpush1.msra.mxu0 0.0
    %179 = vmatprep.mubr.f32.mxu0 0.0
    %180 = vmatmul.mubr.f32.gmra.mrb[0].mxu0 %v76
    %v181 = vpop.f32.mrb[0].mxu0
    %v182 = vadd.f32 %v113, %v181
    %v183 = vpop.f32.mrb[0].mxu0
    %184 = vmatprep.mubr.f32.mxu0 0.0
    %185 = vmatmul.mubr.f32.gmra.mrb[0].mxu0 %v77
    %v186 = vpop.f32.mrb[0].mxu0
    %v187 = vadd.f32 %v113, %v186
    %v188 = vpop.f32.mrb[0].mxu0
    %189 = vmatprep.mubr.f32.mxu0 0.0
    %190 = vmatmul.mubr.f32.gmra.mrb[0].mxu0 %v78
    %v191 = vpop.f32.mrb[0].mxu0
    %v192 = vadd.f32 %v113, %v191
    %v193 = vpop.f32.mrb[0].mxu0
    %194 = vmatprep.mubr.f32.mxu0 0.0
    %195 = vmatmul.mubr.f32.gmra.mrb[0].mxu0 %v79
    %v196 = vpop.f32.mrb[0].mxu0
    %v197 = vadd.f32 %v113, %v196
    %v198 = vpop.f32.mrb[0].mxu0
    %199 = vmatprep.mubr.f32.mxu0 0.0
    %200 = vmatmul.mubr.f32.gmra.mrb[0].mxu0 %v80
    %v201 = vpop.f32.mrb[0].mxu0
    %v202 = vadd.f32 %v113, %v201
    %v203 = vpop.f32.mrb[0].mxu0
    %204 = vmatprep.mubr.f32.mxu0 0.0
    %205 = vmatmul.mubr.f32.gmra.mrb[0].mxu0 %v81
    %v206 = vpop.f32.mrb[0].mxu0
    %v207 = vadd.f32 %v113, %v206
    %v208 = vpop.f32.mrb[0].mxu0
    %209 = vmatprep.mubr.f32.mxu0 0.0
    %210 = vmatmul.mubr.f32.gmra.mrb[0].mxu0 %v82
    %v211 = vpop.f32.mrb[0].mxu0
    %v212 = vadd.f32 %v113, %v211
    %v213 = vpop.f32.mrb[0].mxu0
    %214 = vmatprep.mubr.f32.mxu0 0.0
    %215 = vmatmul.mubr.f32.gmra.mrb[0].mxu0 %v83
    %v216 = vpop.f32.mrb[0].mxu0
    %v217 = vadd.f32 %v113, %v216
    %v218 = vpop.f32.mrb[0].mxu0
    %219 = vmatprep.mubr.f32.mxu0 0.0
    %220 = vmatmul.mubr.f32.gmra.mrb[0].mxu0 %v84
    %v221 = vpop.f32.mrb[0].mxu0
    %v222 = vadd.f32 %v113, %v221
    %v223 = vpop.f32.mrb[0].mxu0
    %224 = vmatprep.mubr.f32.mxu0 0.0
    %225 = vmatmul.mubr.f32.gmra.mrb[0].mxu0 %v85
    %v226 = vpop.f32.mrb[0].mxu0
    %v227 = vadd.f32 %v113, %v226
    %v228 = vpop.f32.mrb[0].mxu0
    %229 = vmatprep.mubr.f32.mxu0 0.0
    %230 = vmatmul.mubr.f32.gmra.mrb[0].mxu0 %v86
    %v231 = vpop.f32.mrb[0].mxu0
    %v232 = vadd.f32 %v113, %v231
    %v233 = vpop.f32.mrb[0].mxu0
    %234 = vmatprep.mubr.f32.mxu0 0.0
    %235 = vmatmul.mubr.f32.gmra.mrb[0].mxu0 %v87
    %v236 = vpop.f32.mrb[0].mxu0
    %v237 = vadd.f32 %v113, %v236
    %v238 = vpop.f32.mrb[0].mxu0
    %239 = vmatprep.mubr.f32.mxu0 0.0
    %240 = vmatmul.mubr.f32.gmra.mrb[0].mxu0 %v88
    %v241 = vpop.f32.mrb[0].mxu0
    %v242 = vadd.f32 %v113, %v241
    %v243 = vpop.f32.mrb[0].mxu0
    %244 = vmatprep.mubr.f32.mxu0 0.0
    %245 = vmatmul.mubr.f32.gmra.mrb[0].mxu0 %v89
    %v246 = vpop.f32.mrb[0].mxu0
    %v247 = vadd.f32 %v113, %v246
    %v248 = vpop.f32.mrb[0].mxu0
    %249 = vmatprep.mubr.f32.mxu0 0.0
    %250 = vmatmul.mubr.f32.gmra.mrb[0].mxu0 %v90
    %v251 = vpop.f32.mrb[0].mxu0
    %v252 = vadd.f32 %v113, %v251
    %v253 = vpop.f32.mrb[0].mxu0
    %254 = vmatprep.mubr.f32.mxu0 0.0
    %255 = vmatmul.mubr.f32.gmra.mrb[0].mxu0 %v91
    %v256 = vpop.f32.mrb[0].mxu0
    %v257 = vadd.f32 %v113, %v256
    %v258 = vpop.f32.mrb[0].mxu0
    %259 = vdwg.mxu0
    %v260 = vtanh.pop %v182
    %v261 = vtanh.pop %v187
    %v262 = vtanh.pop %v192
    %v263 = vtanh.pop %v197
    %v264 = vtanh.pop %v202
    %v265 = vtanh.pop %v207
    %v266 = vtanh.pop %v212
    %v267 = vtanh.pop %v217
    %v268 = vtanh.pop %v222
    %v269 = vtanh.pop %v227
    %v270 = vtanh.pop %v232
    %v271 = vtanh.pop %v237
    %v272 = vtanh.pop %v242
    %v273 = vtanh.pop %v247
    %v274 = vtanh.pop %v252
    %v275 = vtanh.pop %v257
    %v276 = vld [vmem:[#allocation8] sm:$0xff]
    %v277 = vld [vmem:[#allocation8 + $0x8] sm:$0xff]
    %v278 = vld [vmem:[#allocation8 + $0x10] sm:$0xff]
    %v279 = vld [vmem:[#allocation8 + $0x18] sm:$0xff]
    %v280 = vld [vmem:[#allocation8 + $0x20] sm:$0xff]
    %v281 = vld [vmem:[#allocation8 + $0x28] sm:$0xff]
    %v282 = vld [vmem:[#allocation8 + $0x30] sm:$0xff]
    %v283 = vld [vmem:[#allocation8 + $0x38] sm:$0xff]
    %v284 = vld [vmem:[#allocation8 + $0x40] sm:$0xff]
    %v285 = vld [vmem:[#allocation8 + $0x48] sm:$0xff]
    %v286 = vld [vmem:[#allocation8 + $0x50] sm:$0xff]
    %v287 = vld [vmem:[#allocation8 + $0x58] sm:$0xff]
    %v288 = vld [vmem:[#allocation8 + $0x60] sm:$0xff]
    %v289 = vld [vmem:[#allocation8 + $0x68] sm:$0xff]
    %v290 = vld [vmem:[#allocation8 + $0x70] sm:$0xff]
    %v291 = vld [vmem:[#allocation8 + $0x78] sm:$0xff]
    %292 = vmatprep.subr.mxu0 0.0
    %293 = vmatpush1.msra.mxu0 %v276
    %294 = vmatprep.subr.mxu0 0.0
    %295 = vmatpush1.msra.mxu0 %v277
    %296 = vmatprep.subr.mxu0 0.0
    %297 = vmatpush1.msra.mxu0 %v278
    %298 = vmatprep.subr.mxu0 0.0
    %299 = vmatpush1.msra.mxu0 %v279
    %300 = vmatprep.subr.mxu0 0.0
    %301 = vmatpush1.msra.mxu0 %v280
    %302 = vmatprep.subr.mxu0 0.0
    %303 = vmatpush1.msra.mxu0 %v281
    %304 = vmatprep.subr.mxu0 0.0
    %305 = vmatpush1.msra.mxu0 %v282
    %306 = vmatprep.subr.mxu0 0.0
    %307 = vmatpush1.msra.mxu0 %v283
    %308 = vmatprep.subr.mxu0 0.0
    %309 = vmatpush1.msra.mxu0 %v284
    %310 = vmatprep.subr.mxu0 0.0
    %311 = vmatpush1.msra.mxu0 %v285
    %312 = vmatprep.subr.mxu0 0.0
    %313 = vmatpush1.msra.mxu0 %v286
    %314 = vmatprep.subr.mxu0 0.0
    %315 = vmatpush1.msra.mxu0 %v287
    %316 = vmatprep.subr.mxu0 0.0
    %317 = vmatpush1.msra.mxu0 %v288
    %318 = vmatprep.subr.mxu0 0.0
    %319 = vmatpush1.msra.mxu0 %v289
    %320 = vmatprep.subr.mxu0 0.0
    %321 = vmatpush1.msra.mxu0 %v290
    %322 = vmatprep.subr.mxu0 0.0
    %323 = vmatpush1.msra.mxu0 %v291
    %324 = vmatprep.subr.mxu0 0.0
    %325 = vmatpush1.msra.mxu0 0.0
    %326 = vmatprep.subr.mxu0 0.0
    %327 = vmatpush1.msra.mxu0 0.0
    %328 = vmatprep.subr.mxu0 0.0
    %329 = vmatpush1.msra.mxu0 0.0
    %330 = vmatprep.subr.mxu0 0.0
    %331 = vmatpush1.msra.mxu0 0.0
    %332 = vmatprep.subr.mxu0 0.0
    %333 = vmatpush1.msra.mxu0 0.0
    %334 = vmatprep.subr.mxu0 0.0
    %335 = vmatpush1.msra.mxu0 0.0
    %336 = vmatprep.subr.mxu0 0.0
    %337 = vmatpush1.msra.mxu0 0.0
    %338 = vmatprep.subr.mxu0 0.0
    %339 = vmatpush1.msra.mxu0 0.0
    %340 = vmatprep.subr.mxu0 0.0
    %341 = vmatpush1.msra.mxu0 0.0
    %342 = vmatprep.subr.mxu0 0.0
    %343 = vmatpush1.msra.mxu0 0.0
    %344 = vmatprep.subr.mxu0 0.0
    %345 = vmatpush1.msra.mxu0 0.0
    %346 = vmatprep.subr.mxu0 0.0
    %347 = vmatpush1.msra.mxu0 0.0
    %348 = vmatprep.subr.mxu0 0.0
    %349 = vmatpush1.msra.mxu0 0.0
    %350 = vmatprep.subr.mxu0 0.0
    %351 = vmatpush1.msra.mxu0 0.0
    %352 = vmatprep.subr.mxu0 0.0
    %353 = vmatpush1.msra.mxu0 0.0
    %354 = vmatprep.subr.mxu0 0.0
    %355 = vmatpush1.msra.mxu0 0.0
    %356 = vmatprep.mubr.f32.mxu0 0.0
    %357 = vmatmul.mubr.f32.gmra.mrb[0].mxu0 %v260
    %v358 = vpop.f32.mrb[0].mxu0
    %v359 = vadd.f32 0.0, %v358
    %v360 = vpop.f32.mrb[0].mxu0
    %361 = vmatprep.mubr.f32.mxu0 0.0
    %362 = vmatmul.mubr.f32.gmra.mrb[0].mxu0 %v261
    %v363 = vpop.f32.mrb[0].mxu0
    %v364 = vadd.f32 0.0, %v363
    %v365 = vpop.f32.mrb[0].mxu0
    %366 = vmatprep.mubr.f32.mxu0 0.0
    %367 = vmatmul.mubr.f32.gmra.mrb[0].mxu0 %v262
    %v368 = vpop.f32.mrb[0].mxu0
    %v369 = vadd.f32 0.0, %v368
    %v370 = vpop.f32.mrb[0].mxu0
    %371 = vmatprep.mubr.f32.mxu0 0.0
    %372 = vmatmul.mubr.f32.gmra.mrb[0].mxu0 %v263
    %v373 = vpop.f32.mrb[0].mxu0
    %v374 = vadd.f32 0.0, %v373
    %v375 = vpop.f32.mrb[0].mxu0
    %376 = vmatprep.mubr.f32.mxu0 0.0
    %377 = vmatmul.mubr.f32.gmra.mrb[0].mxu0 %v264
    %v378 = vpop.f32.mrb[0].mxu0
    %v379 = vadd.f32 0.0, %v378
    %v380 = vpop.f32.mrb[0].mxu0
    %381 = vmatprep.mubr.f32.mxu0 0.0
    %382 = vmatmul.mubr.f32.gmra.mrb[0].mxu0 %v265
    %v383 = vpop.f32.mrb[0].mxu0
    %v384 = vadd.f32 0.0, %v383
    %v385 = vpop.f32.mrb[0].mxu0
    %386 = vmatprep.mubr.f32.mxu0 0.0
    %387 = vmatmul.mubr.f32.gmra.mrb[0].mxu0 %v266
    %v388 = vpop.f32.mrb[0].mxu0
    %v389 = vadd.f32 0.0, %v388
    %v390 = vpop.f32.mrb[0].mxu0
    %391 = vmatprep.mubr.f32.mxu0 0.0
    %392 = vmatmul.mubr.f32.gmra.mrb[0].mxu0 %v267
    %v393 = vpop.f32.mrb[0].mxu0
    %v394 = vadd.f32 0.0, %v393
    %v395 = vpop.f32.mrb[0].mxu0
    %396 = vmatprep.mubr.f32.mxu0 0.0
    %397 = vmatmul.mubr.f32.gmra.mrb[0].mxu0 %v268
    %v398 = vpop.f32.mrb[0].mxu0
    %v399 = vadd.f32 0.0, %v398
    %v400 = vpop.f32.mrb[0].mxu0
    %401 = vmatprep.mubr.f32.mxu0 0.0
    %402 = vmatmul.mubr.f32.gmra.mrb[0].mxu0 %v269
    %v403 = vpop.f32.mrb[0].mxu0
    %v404 = vadd.f32 0.0, %v403
    %v405 = vpop.f32.mrb[0].mxu0
    %406 = vmatprep.mubr.f32.mxu0 0.0
    %407 = vmatmul.mubr.f32.gmra.mrb[0].mxu0 %v270
    %v408 = vpop.f32.mrb[0].mxu0
    %v409 = vadd.f32 0.0, %v408
    %v410 = vpop.f32.mrb[0].mxu0
    %411 = vmatprep.mubr.f32.mxu0 0.0
    %412 = vmatmul.mubr.f32.gmra.mrb[0].mxu0 %v271
    %v413 = vpop.f32.mrb[0].mxu0
    %v414 = vadd.f32 0.0, %v413
    %v415 = vpop.f32.mrb[0].mxu0
    %416 = vmatprep.mubr.f32.mxu0 0.0
    %417 = vmatmul.mubr.f32.gmra.mrb[0].mxu0 %v272
    %v418 = vpop.f32.mrb[0].mxu0
    %v419 = vadd.f32 0.0, %v418
    %v420 = vpop.f32.mrb[0].mxu0
    %421 = vmatprep.mubr.f32.mxu0 0.0
    %422 = vmatmul.mubr.f32.gmra.mrb[0].mxu0 %v273
    %v423 = vpop.f32.mrb[0].mxu0
    %v424 = vadd.f32 0.0, %v423
    %v425 = vpop.f32.mrb[0].mxu0
    %426 = vmatprep.mubr.f32.mxu0 0.0
    %427 = vmatmul.mubr.f32.gmra.mrb[0].mxu0 %v274
    %v428 = vpop.f32.mrb[0].mxu0
    %v429 = vadd.f32 0.0, %v428
    %v430 = vpop.f32.mrb[0].mxu0
    %431 = vmatprep.mubr.f32.mxu0 0.0
    %432 = vmatmul.mubr.f32.gmra.mrb[0].mxu0 %v275
    %v433 = vpop.f32.mrb[0].mxu0
    %v434 = vadd.f32 0.0, %v433
    %v435 = vpop.f32.mrb[0].mxu0
    %436 = vdwg.mxu0
    %v437 = vsub.f32 %v359, %v399
    %v438 = vsub.f32 %v364, %v404
    %v439 = vsub.f32 %v369, %v409
    %v440 = vsub.f32 %v374, %v414
    %v441 = vsub.f32 %v379, %v419
    %v442 = vsub.f32 %v384, %v424
    %v443 = vsub.f32 %v389, %v429
    %v444 = vsub.f32 %v394, %v434
    %v445 = vxor.u32 %v437, 2147483648
    %v446 = vxor.u32 %v438, 2147483648
    %v447 = vxor.u32 %v439, 2147483648
    %v448 = vxor.u32 %v440, 2147483648
    %v449 = vxor.u32 %v441, 2147483648
    %v450 = vxor.u32 %v442, 2147483648
    %v451 = vxor.u32 %v443, 2147483648
    %v452 = vxor.u32 %v444, 2147483648
    %v453 = vmul.f32 %v445, 1.442695
    %v454 = vpow.pop %v453
    %v455 = vmul.f32 %v446, 1.442695
    %v456 = vpow.pop %v455
    %v457 = vmul.f32 %v447, 1.442695
    %v458 = vpow.pop %v457
    %v459 = vmul.f32 %v448, 1.442695
    %v460 = vpow.pop %v459
    %v461 = vmul.f32 %v449, 1.442695
    %v462 = vpow.pop %v461
    %v463 = vmul.f32 %v450, 1.442695
    %v464 = vpow.pop %v463
    %v465 = vmul.f32 %v451, 1.442695
    %v466 = vpow.pop %v465
    %v467 = vmul.f32 %v452, 1.442695
    %v468 = vpow.pop %v467
    %v469 = vadd.f32 %v454, 1.0
    %v470 = vadd.f32 %v456, 1.0
    %v471 = vadd.f32 %v458, 1.0
    %v472 = vadd.f32 %v460, 1.0
    %v473 = vadd.f32 %v462, 1.0
    %v474 = vadd.f32 %v464, 1.0
    %v475 = vadd.f32 %v466, 1.0
    %v476 = vadd.f32 %v468, 1.0
    %v477 = vrcp.pop %v469
    %v478 = vmul.f32 1.0, %v477
    %v479 = vrcp.pop %v470
    %v480 = vmul.f32 1.0, %v479
    %v481 = vrcp.pop %v471
    %v482 = vmul.f32 1.0, %v481
    %v483 = vrcp.pop %v472
    %v484 = vmul.f32 1.0, %v483
    %v485 = vrcp.pop %v473
    %v486 = vmul.f32 1.0, %v485
    %v487 = vrcp.pop %v474
    %v488 = vmul.f32 1.0, %v487
    %v489 = vrcp.pop %v475
    %v490 = vmul.f32 1.0, %v489
    %v491 = vrcp.pop %v476
    %v492 = vmul.f32 1.0, %v491
    %v493 = vsub.f32 %v76, %v84
    %v494 = vsub.f32 %v77, %v85
    %v495 = vsub.f32 %v78, %v86
    %v496 = vsub.f32 %v79, %v87
    %v497 = vsub.f32 %v80, %v88
    %v498 = vsub.f32 %v81, %v89
    %v499 = vsub.f32 %v82, %v90
    %v500 = vsub.f32 %v83, %v91
    %v501 = vmul.f32 %v478, %v493
    %v502 = vmul.f32 %v480, %v494
    %v503 = vmul.f32 %v482, %v495
    %v504 = vmul.f32 %v484, %v496
    %v505 = vmul.f32 %v486, %v497
    %v506 = vmul.f32 %v488, %v498
    %v507 = vmul.f32 %v490, %v499
    %v508 = vmul.f32 %v492, %v500
    %v509 = vadd.f32 %v84, %v501
    %v510 = vadd.f32 %v85, %v502
    %v511 = vadd.f32 %v86, %v503
    %v512 = vadd.f32 %v87, %v504
    %v513 = vadd.f32 %v88, %v505
    %v514 = vadd.f32 %v89, %v506
    %v515 = vadd.f32 %v90, %v507
    %v516 = vadd.f32 %v91, %v508
    %517 = vst [vmem:[#allocation10] sm:$0xff] %v509
    %518 = vst [vmem:[#allocation10 + $0x8] sm:$0xff] %v510
    %519 = vst [vmem:[#allocation10 + $0x10] sm:$0xff] %v511
    %520 = vst [vmem:[#allocation10 + $0x18] sm:$0xff] %v512
    %521 = vst [vmem:[#allocation10 + $0x20] sm:$0xff] %v513
    %522 = vst [vmem:[#allocation10 + $0x28] sm:$0xff] %v514
    %523 = vst [vmem:[#allocation10 + $0x30] sm:$0xff] %v515
    %524 = vst [vmem:[#allocation10 + $0x38] sm:$0xff] %v516
    // Predicated region
    $region38: #{tpu_custom_call.1} parent=1 // pred_check
      _
    $region39: #{tpu_custom_call.1} parent=1 // pred_check_branch
      %526 = sbr.rel (0) target = $region41
    $region40: #{tpu_custom_call.1} parent=1 // pred_region
      %s528 = ssub.s32 1024, 1024
      %529 = vsyncadd [#allocation4], %s528
      %s530 = sshll.u32 [#allocation10], 4
      %s531 = int_to_ptr.vmem [resolvable:$true] %s530
      %536 = dma.vmem_to_hbm [thread:$0]  %s531, 1024, %s5, [#allocation4], 128, 128, 8
    $region41: #{tpu_custom_call.1} parent=1 // pred_fallthru
      _
    // Predicated region
    $region42: #{tpu_custom_call.1} parent=1 // pred_check
      _
    $region43: #{tpu_custom_call.1} parent=1 // pred_check_branch
      %538 = sbr.rel (0) target = $region45
    $region44: #{tpu_custom_call.1} parent=1 // pred_region
      %539 = dma.done [#allocation4], 1024
    $region45: #{tpu_custom_call.1} parent=1 // pred_fallthru
      _
    %540 = vsyncpa [#allocation3], 1
    %541 = vsyncpa [#allocation6], 1
    %542 = vsyncpa [#allocation9], 1
    %543 = vsyncpa [#allocation4], 1

</llo_original>
